<compile_context>
chip_gen: v5e
topology: v5e:2x2
jax: 0.10.0
libtpu: 0.0.40
codegen_flags: <defaults>
</compile_context>

<pallas_src>
import functools

import jax
import jax.numpy as jnp
from jax.experimental import pallas as pl
from jax.experimental.pallas import tpu as pltpu

_LANES = 128            # TPU lane width (last dim of the dense (rows, 128) view)
_ROW_ALIGN = 32         # int8 native sublane tile -> keep block rows a multiple of 32
_MAX_BLOCK_ROWS = 2048  # 2048x128: 1 MiB int32 in + 256 KiB int8 out per buffer
_PALLAS_MIN_ELEMS = 64 * 1024  # below this, pallas_call fixed cost dominates


def _round_up(x, m):
    return ((x + m - 1) // m) * m


def _valid_mask_kernel(gt_ref, mask_ref, *, ignore_index):
    # One VPU compare per vreg, int8 out (4x less store bandwidth than int32,
    # unmasked lane-dense stores). ignore_index is a compile-time constant
    # (one compile per Criterion config — fine).
    mask_ref[...] = (gt_ref[...] != ignore_index).astype(jnp.int8)


def valid_mask_int8(flat_gt, ignore_index):
    """Returns (flat_gt != ignore_index) as an int8 mask (nonzero == valid).

    int8 is kept end-to-end to avoid an extra HBM conversion pass; consumers
    should treat nonzero as True (same truth values as torch's .ne()).
    """
    assert flat_gt.ndim == 1, flat_gt.shape
    assert jnp.issubdtype(flat_gt.dtype, jnp.integer), flat_gt.dtype
    n = flat_gt.shape[0]

    # Fast path: tiny inputs, or a ragged tail (n % 128 != 0) whose handling
    # would force a full copy of gt anyway — a single fused XLA compare is
    # strictly cheaper than pallas_call fixed costs + that copy.
    if n < _PALLAS_MIN_ELEMS or n % _LANES != 0:
        return (flat_gt != ignore_index).astype(jnp.int8)

    rows = n // _LANES
    gt2d = flat_gt.reshape(rows, _LANES)  # contiguous -> free view, lane-dense

    if rows <= 2 * _MAX_BLOCK_ROWS:
        # Guarantee >= 2 grid steps so both v7x TensorCores get a row-block.
        block_rows = min(_round_up(pl.cdiv(rows, 2), _ROW_ALIGN), _MAX_BLOCK_ROWS)
    else:
        block_rows = _MAX_BLOCK_ROWS
    grid = pl.cdiv(rows, block_rows)  # Pallas masks the uneven tail block

    mask2d = pl.pallas_call(
        functools.partial(_valid_mask_kernel, ignore_index=ignore_index),
        out_shape=jax.ShapeDtypeStruct((rows, _LANES), jnp.int8),
        grid=(grid,),
        in_specs=[pl.BlockSpec((block_rows, _LANES), lambda i: (i, 0))],
        out_specs=pl.BlockSpec((block_rows, _LANES), lambda i: (i, 0)),
        compiler_params=pltpu.CompilerParams(dimension_semantics=("parallel",)),
    )(gt2d)

    return mask2d.reshape(-1)  # free view back to (n,)


class Criterion:
    """JAX/Pallas port of ynmt Criterion (abstract base)."""

    def __init__(self, label_number, ignore_index):
        self.label_number = label_number
        self.ignore_index = ignore_index
        # TODO(synk): reference keeps `self.statistics = Statistics(set())`
        # (training bookkeeping, no numerical effect on forward) — not ported.

    def forward(self, logits, ground_truth):
        assert logits.ndim - 1 == ground_truth.ndim, (
            f"Wrong number of dimension: #1 arg:{logits.shape}, #2 arg: {ground_truth.shape}"
        )
        assert logits.shape[:-1] == ground_truth.shape, (
            f"Wrong size: #1 arg:{logits.shape}, #2 arg: {ground_truth.shape}"
        )
        assert logits.shape[-1] == self.label_number, (
            f"Number of label should be {self.label_number} instead: #1 arg:{logits.shape[-1]}"
        )
        flat_logits = logits.reshape(-1, logits.shape[-1])
        flat_gt = ground_truth.reshape(-1)
        valid_mask = valid_mask_int8(flat_gt, self.ignore_index)
        return self.compute_loss(flat_logits, flat_gt, valid_mask)

    # TODO(synk): compute_loss is abstract (NotImplementedError) in the reference;
    # concrete subclasses should implement a fused Pallas loss kernel that streams
    # the (N, V) logits and recomputes `gt != ignore_index` inline (skipping the
    # standalone mask pass entirely). The base class returns the flattened tensors
    # + int8 mask so forward semantics are testable.
    def compute_loss(self, logits, ground_truth, valid_mask):
        return logits, ground_truth, valid_mask


if __name__ == "__main__":
    key = jax.random.PRNGKey(0)
    k1, k2, k3, k4 = jax.random.split(key, 4)

    ignore_index = 0
    label_number = 32
    crit = Criterion(label_number=label_number, ignore_index=ignore_index)

    # --- Case A: small shapes through forward (XLA fast path) ---------------
    batch, seq = 2, 8
    logits = jax.random.normal(k1, (batch, seq, label_number), dtype=jnp.float32)
    gt = jax.random.randint(k2, (batch, seq), minval=0, maxval=label_number,
                            dtype=jnp.int32)
    flat_logits, flat_gt, valid_mask = crit.forward(logits, gt)
    jax.block_until_ready((flat_logits, flat_gt, valid_mask))

    ref_mask = gt.reshape(-1) != ignore_index
    assert flat_logits.shape == (batch * seq, label_number)
    assert flat_gt.shape == (batch * seq,)
    assert valid_mask.shape == (batch * seq,)
    assert bool(jnp.all((valid_mask != 0) == ref_mask))

    # --- Case B: 128-aligned, large-enough N through forward (Pallas path) --
    batch_b, seq_b = 4, 16384  # N = 65536 = 512 rows of 128 -> grid of 2 blocks
    logits_b = jax.random.normal(k3, (batch_b, seq_b, label_number),
                                 dtype=jnp.float32)
    gt_b = jax.random.randint(k4, (batch_b, seq_b), minval=0,
                              maxval=label_number, dtype=jnp.int32)
    _, _, mask_b = crit.forward(logits_b, gt_b)
    jax.block_until_ready(mask_b)
    ref_b = gt_b.reshape(-1) != ignore_index
    assert mask_b.shape == (batch_b * seq_b,)
    assert bool(jnp.all((mask_b != 0) == ref_b))

    # --- Case C: direct kernel check with a partial tail row-block ----------
    n_c = 6150 * _LANES  # rows=6150 -> block_rows=2048, grid=4, ragged last block
    gt_c = jax.random.randint(jax.random.PRNGKey(7), (n_c,), minval=0, maxval=7,
                              dtype=jnp.int32)
    mask_c = valid_mask_int8(gt_c, ignore_index=3)
    jax.block_until_ready(mask_c)
    assert bool(jnp.all((mask_c != 0) == (gt_c != 3)))

    print("KERNEL_OK")
</pallas_src>

<mosaic_0001>
module attributes {stable_mosaic.version = 11 : i64} {
  func.func @_valid_mask_kernel(%arg0: i32, %arg1: memref<256x128xi32, #tpu.memory_space<vmem>>, %arg2: memref<256x128xi8, #tpu.memory_space<vmem>>) attributes {dimension_semantics = [#tpu.dimension_semantics<parallel>], iteration_bounds = array<i64: 2>, scalar_prefetch = 0 : i64, scratch_operands = 0 : i64, tpu.core_type = #tpu.core_type<tc>, window_params = [{transform_indices = @transform_0, window_bounds = array<i64: 256, 128>}, {transform_indices = @transform_1, window_bounds = array<i64: 256, 128>}]} {
    %c0 = arith.constant 0 : index
    %c0_0 = arith.constant 0 : index
    %0 = vector.load %arg1[%c0, %c0_0] : memref<256x128xi32, #tpu.memory_space<vmem>>, vector<256x128xi32>
    %c0_i32 = arith.constant 0 : i32
    %1 = vector.broadcast %c0_i32 : i32 to vector<256x128xi32>
    %2 = arith.cmpi ne, %0, %1 : vector<256x128xi32>
    %3 = arith.extui %2 : vector<256x128xi1> to vector<256x128xi8>
    %c0_1 = arith.constant 0 : index
    %c0_2 = arith.constant 0 : index
    %4 = vector.load %arg2[%c0_1, %c0_2] : memref<256x128xi8, #tpu.memory_space<vmem>>, vector<256x128xi8>
    tpu.vector_store %arg2[%c0_1, %c0_2], %3 {strides = array<i32>} : memref<256x128xi8, #tpu.memory_space<vmem>>, vector<256x128xi8>,
    return
  }
  func.func @transform_0(%arg0: i32) -> (i32, i32) {
    %c0_i32 = arith.constant 0 : i32
    %c0_i32_0 = arith.constant 0 : i32
    return %arg0, %c0_i32 : i32, i32
  }
  func.func @transform_1(%arg0: i32) -> (i32, i32) {
    %c0_i32 = arith.constant 0 : i32
    %c0_i32_0 = arith.constant 0 : i32
    return %arg0, %c0_i32 : i32, i32
  }
}

</mosaic_0001>

<llo_original>
// kernel: tpu_custom_call.1
$region0: #{tpu_custom_call.1}
  #allocation0 [shape = 'u32[]', space=smem, size = 0x4, offset = 0x4, fixed_abs, tag = 'smem constant byte address 0x4 - core index']
  #allocation1 [shape = 'u32[72,128]{1,0:T(1,128)}', space=vmem, size = 0x9000, scoped, tag = 'internal scratch']
  %s0 = inlined_call_operand.hbm [shape: s32[512,128], index: 0, kind: input, shape index: {}]
  %s1 = inlined_call_operand.hbm [shape: s8[512,128], index: 1, kind: output, shape index: {}]
  %s2 = sld [smem:[#allocation0]]
  $region41: #{tpu_custom_call.1} parent=0
    _
  %s4 = ssub.s32 1, %s2
  %s5 = scalar_select 0, %s4, %s2
  $region1: #{tpu_custom_call.1} parent=0
    #allocation2 [shape = 'u8[262144]{0}', space=vmem, size = 0x40000, scoped, tag = 'input window, operand 0']
    #allocation3 [shape = 's32[2]{0}', space=sflag, size = 0x8, scoped, tag = 'scoped memory for tpu_custom_call.1']
    #allocation4 [shape = 's32[2]{0}', space=sflag, size = 0x8, scoped, tag = 'scoped memory for tpu_custom_call.1']
    #allocation5 [shape = 'u8[65536]{0}', space=vmem, size = 0x10000, scoped, tag = 'output window, operand 0']
    %6 = vsyncpa [#allocation3], 0
    %s7 = scalar_lea.sflag [#allocation3], 1
    %8 = vsyncpa %s7, 0
    %9 = vsyncpa [#allocation4], 0
    %s10 = scalar_lea.sflag [#allocation4], 1
    %11 = vsyncpa %s10, 0
    loop: start=0, step=1, limit=4
    $region2: #{tpu_custom_call.1} parent=1 // loop_pre_header
      _
    $region3: #{tpu_custom_call.1} parent=1 // loop_header
      %s13 = sphi 0, %s17
      %p14 = scmp.ge.s32.totalorder %s13, 4
      %s23 = sphi 0, %s25
      %s26 = sphi 0, %s23
      %s27 = sphi 0, %s26
      %s43 = sphi 0, %s27
      %s49 = sphi 0, %s51
      %s52 = sphi 0, %s49
      %s53 = sphi 0, %s52
      %s69 = sphi 0, %s53
    $region4: #{tpu_custom_call.1} parent=1 // loop_header_branch
      %16 = sbr.rel (%p14) target = $region8
    $region5: #{tpu_custom_call.1} parent=1 // loop_body
      %s18 = ssub.s32 %s13, 1
      %s19 = ssub.s32 %s13, 2
      %s20 = sadd.s32 %s13, 1
      %s21 = ssub.s32 %s13, %s20
      %p22 = scmp.eq.s32.totalorder %s21, 0
      %s24 = sadd.s32 %s23, 1
      %s25 = scalar_select %p22, %s23, %s24
      %p28 = pneg %p22
      %p29 = scmp.eq.s32.totalorder %s13, 1
      %p30 = por %p28, %p29
      %p31 = scmp.ne.s32.totalorder %s23, %s26
      %p32 = scmp.eq.s32.totalorder %s13, 0
      %p33 = por %p31, %p32
      %p34 = scmp.ne.s32.totalorder %s23, %s26
      %p35 = scmp.eq.s32.totalorder %s18, 1
      %p36 = por %p34, %p35
      %p37 = scmp.ne.s32.totalorder %s26, %s27
      %p38 = scmp.eq.s32.totalorder %s18, 0
      %p39 = por %p37, %p38
      %p40 = scmp.ne.s32.totalorder %s26, %s27
      %p41 = scmp.eq.s32.totalorder %s19, 1
      %p42 = por %p40, %p41
      %p44 = scmp.ne.s32.totalorder %s27, %s43
      %p45 = scmp.eq.s32.totalorder %s19, 0
      %p46 = por %p44, %p45
      %s47 = ssub.s32 %s13, %s20
      %p48 = scmp.eq.s32.totalorder %s47, 0
      %s50 = sadd.s32 %s49, 1
      %s51 = scalar_select %p48, %s49, %s50
      %p54 = pneg %p48
      %p55 = scmp.eq.s32.totalorder %s13, 1
      %p56 = por %p54, %p55
      %p57 = scmp.ne.s32.totalorder %s49, %s52
      %p58 = scmp.eq.s32.totalorder %s13, 0
      %p59 = por %p57, %p58
      %p60 = scmp.ne.s32.totalorder %s49, %s52
      %p61 = scmp.eq.s32.totalorder %s18, 1
      %p62 = por %p60, %p61
      %p63 = scmp.ne.s32.totalorder %s52, %s53
      %p64 = scmp.eq.s32.totalorder %s18, 0
      %p65 = por %p63, %p64
      %p66 = scmp.ne.s32.totalorder %s52, %s53
      %p67 = scmp.eq.s32.totalorder %s19, 1
      %p68 = por %p66, %p67
      %p70 = scmp.ne.s32.totalorder %s53, %s69
      %p71 = scmp.eq.s32.totalorder %s19, 0
      %p72 = por %p70, %p71
      %p73 = scmp.le.s32.totalorder 1, %s13
      %p74 = scmp.lt.s32.totalorder %s13, 3
      %p75 = pnand %p73, %p74
      %p76 = pneg %p75
      // Predicated region
      $region9: #{tpu_custom_call.1} parent=5 // pred_check
        _
      $region10: #{tpu_custom_call.1} parent=5 // pred_check_branch
        %78 = sbr.rel (%p75) target = $region12
      $region11: #{tpu_custom_call.1} parent=5 // pred_region
        %s79 = ssub.s32 %s13, 1
      $region12: #{tpu_custom_call.1} parent=5 // pred_fallthru
        _
      %p80 = scmp.lt.s32.totalorder %s13, 2
      // Predicated region
      $region13: #{tpu_custom_call.1} parent=5 // pred_check
        %p81 = pneg %p80
      $region14: #{tpu_custom_call.1} parent=5 // pred_check_branch
        %83 = sbr.rel (%p81) target = $region16
      $region15: #{tpu_custom_call.1} parent=5 // pred_region
        // Predicated region
        $region17: #{tpu_custom_call.1} parent=15 // pred_check
          %p84 = pneg %p33
        $region18: #{tpu_custom_call.1} parent=15 // pred_check_branch
          %86 = sbr.rel (%p84) target = $region20
        $region19: #{tpu_custom_call.1} parent=15 // pred_region
          %s87 = sand.u32 %s23, 1
          %s88 = scalar_lea.sflag [#allocation3], %s87
          %s89 = sand.u32 %s23, 1
          %s90 = smul.addr %s89, 256
          %s91 = scalar_lea.vmem [#allocation2], %s90
          %s92 = smul.u32 32, %s13
          %94 = vsyncadd %s88, 0
          %s95 = smul.addr %s92, 8
          %s96 = scalar_lea.hbm %s0, %s95
          %s97 = sshll.u32 %s96, 4
          %s98 = int_to_ptr.hbm [resolvable:$true] %s97
          %s99 = sshll.u32 %s91, 4
          %s100 = int_to_ptr.vmem [resolvable:$true] %s99
          %105 = dma.hbm_to_vmem [thread:$0]  %s98, 4096, %s100, %s88, 128, 128, 8
        $region20: #{tpu_custom_call.1} parent=15 // pred_fallthru
          _
      $region16: #{tpu_custom_call.1} parent=5 // pred_fallthru
        _
      %p106 = scmp.le.s32.totalorder 1, %s13
      %p107 = scmp.lt.s32.totalorder %s13, 3
      %p108 = pnand %p106, %p107
      %p109 = pneg %p108
      // Predicated region
      $region21: #{tpu_custom_call.1} parent=5 // pred_check
        _
      $region22: #{tpu_custom_call.1} parent=5 // pred_check_branch
        %111 = sbr.rel (%p108) target = $region24
      $region23: #{tpu_custom_call.1} parent=5 // pred_region
        %s112 = ssub.s32 %s13, 1
        %s113 = sand.u32 %s26, 1
        %s114 = scalar_lea.sflag [#allocation3], %s113
        %s115 = sand.u32 %s26, 1
        %s116 = smul.addr %s115, 256
        %s117 = scalar_lea.vmem [#allocation2], %s116
        // Predicated region
        $region25: #{tpu_custom_call.1} parent=23 // pred_check
          %p118 = pneg %p39
        $region26: #{tpu_custom_call.1} parent=23 // pred_check_branch
          %120 = sbr.rel (%p118) target = $region28
        $region27: #{tpu_custom_call.1} parent=23 // pred_region
          %122 = dma.done %s114, 4096
        $region28: #{tpu_custom_call.1} parent=23 // pred_fallthru
          _
        %s123 = sand.u32 %s26, 1
        %s124 = scalar_lea.sflag [#allocation3], %s123
        %s125 = sand.u32 %s26, 1
        %s126 = smul.addr %s125, 256
        %s127 = scalar_lea.vmem [#allocation2], %s126
        %p128 = pneg %p39
        %p129 = pneg %p36
        %p130 = pneg %p65
        %p131 = pneg %p62
        %s132 = sand.u32 %s52, 1
        %s133 = scalar_lea.sflag [#allocation4], %s132
        %s134 = sand.u32 %s52, 1
        %s135 = smul.addr %s134, 64
        %s136 = scalar_lea.vmem [#allocation5], %s135
        %s137 = smul.u32 32, %s18
        %s138 = smul.u32 8, %s18
        %v141 = vld [vmem:[%s117] sm:$0xff]
        %v142 = vld [vmem:[%s117 + $0x8] sm:$0xff]
        %v143 = vld [vmem:[%s117 + $0x10] sm:$0xff]
        %v144 = vld [vmem:[%s117 + $0x18] sm:$0xff]
        %v145 = vld [vmem:[%s117 + $0x20] sm:$0xff]
        %v146 = vld [vmem:[%s117 + $0x28] sm:$0xff]
        %v147 = vld [vmem:[%s117 + $0x30] sm:$0xff]
        %v148 = vld [vmem:[%s117 + $0x38] sm:$0xff]
        %v149 = vld [vmem:[%s117 + $0x40] sm:$0xff]
        %v150 = vld [vmem:[%s117 + $0x48] sm:$0xff]
        %v151 = vld [vmem:[%s117 + $0x50] sm:$0xff]
        %v152 = vld [vmem:[%s117 + $0x58] sm:$0xff]
        %v153 = vld [vmem:[%s117 + $0x60] sm:$0xff]
        %v154 = vld [vmem:[%s117 + $0x68] sm:$0xff]
        %v155 = vld [vmem:[%s117 + $0x70] sm:$0xff]
        %v156 = vld [vmem:[%s117 + $0x78] sm:$0xff]
        %v157 = vld [vmem:[%s117 + $0x80] sm:$0xff]
        %v158 = vld [vmem:[%s117 + $0x88] sm:$0xff]
        %v159 = vld [vmem:[%s117 + $0x90] sm:$0xff]
        %v160 = vld [vmem:[%s117 + $0x98] sm:$0xff]
        %v161 = vld [vmem:[%s117 + $0xa0] sm:$0xff]
        %v162 = vld [vmem:[%s117 + $0xa8] sm:$0xff]
        %v163 = vld [vmem:[%s117 + $0xb0] sm:$0xff]
        %v164 = vld [vmem:[%s117 + $0xb8] sm:$0xff]
        %v165 = vld [vmem:[%s117 + $0xc0] sm:$0xff]
        %v166 = vld [vmem:[%s117 + $0xc8] sm:$0xff]
        %v167 = vld [vmem:[%s117 + $0xd0] sm:$0xff]
        %v168 = vld [vmem:[%s117 + $0xd8] sm:$0xff]
        %v169 = vld [vmem:[%s117 + $0xe0] sm:$0xff]
        %v170 = vld [vmem:[%s117 + $0xe8] sm:$0xff]
        %v171 = vld [vmem:[%s117 + $0xf0] sm:$0xff]
        %v172 = vld [vmem:[%s117 + $0xf8] sm:$0xff]
        %vm173 = vcmp.ne.s32.totalorder %v141, 0
        %vm174 = vcmp.ne.s32.totalorder %v142, 0
        %vm175 = vcmp.ne.s32.totalorder %v143, 0
        %vm176 = vcmp.ne.s32.totalorder %v144, 0
        %vm177 = vcmp.ne.s32.totalorder %v145, 0
        %vm178 = vcmp.ne.s32.totalorder %v146, 0
        %vm179 = vcmp.ne.s32.totalorder %v147, 0
        %vm180 = vcmp.ne.s32.totalorder %v148, 0
        %vm181 = vcmp.ne.s32.totalorder %v149, 0
        %vm182 = vcmp.ne.s32.totalorder %v150, 0
        %vm183 = vcmp.ne.s32.totalorder %v151, 0
        %vm184 = vcmp.ne.s32.totalorder %v152, 0
        %vm185 = vcmp.ne.s32.totalorder %v153, 0
        %vm186 = vcmp.ne.s32.totalorder %v154, 0
        %vm187 = vcmp.ne.s32.totalorder %v155, 0
        %vm188 = vcmp.ne.s32.totalorder %v156, 0
        %vm189 = vcmp.ne.s32.totalorder %v157, 0
        %vm190 = vcmp.ne.s32.totalorder %v158, 0
        %vm191 = vcmp.ne.s32.totalorder %v159, 0
        %vm192 = vcmp.ne.s32.totalorder %v160, 0
        %vm193 = vcmp.ne.s32.totalorder %v161, 0
        %vm194 = vcmp.ne.s32.totalorder %v162, 0
        %vm195 = vcmp.ne.s32.totalorder %v163, 0
        %vm196 = vcmp.ne.s32.totalorder %v164, 0
        %vm197 = vcmp.ne.s32.totalorder %v165, 0
        %vm198 = vcmp.ne.s32.totalorder %v166, 0
        %vm199 = vcmp.ne.s32.totalorder %v167, 0
        %vm200 = vcmp.ne.s32.totalorder %v168, 0
        %vm201 = vcmp.ne.s32.totalorder %v169, 0
        %vm202 = vcmp.ne.s32.totalorder %v170, 0
        %vm203 = vcmp.ne.s32.totalorder %v171, 0
        %vm204 = vcmp.ne.s32.totalorder %v172, 0
        %vm205 = vmpackc.low %vm174, %vm173
        %vm206 = vmpackc.low %vm176, %vm175
        %v207 = vsel %vm205, 16711935, 0
        %v208 = vsel %vm206, 16711935, 0
        %v209 = vpack.c.b8 %v208, %v207
        %vm210 = vnez %v209
        %vm211 = vmpackc.low %vm178, %vm177
        %vm212 = vmpackc.low %vm180, %vm179
        %v213 = vsel %vm211, 16711935, 0
        %v214 = vsel %vm212, 16711935, 0
        %v215 = vpack.c.b8 %v214, %v213
        %vm216 = vnez %v215
        %vm217 = vmpackc.low %vm182, %vm181
        %vm218 = vmpackc.low %vm184, %vm183
        %v219 = vsel %vm217, 16711935, 0
        %v220 = vsel %vm218, 16711935, 0
        %v221 = vpack.c.b8 %v220, %v219
        %vm222 = vnez %v221
        %vm223 = vmpackc.low %vm186, %vm185
        %vm224 = vmpackc.low %vm188, %vm187
        %v225 = vsel %vm223, 16711935, 0
        %v226 = vsel %vm224, 16711935, 0
        %v227 = vpack.c.b8 %v226, %v225
        %vm228 = vnez %v227
        %vm229 = vmpackc.low %vm190, %vm189
        %vm230 = vmpackc.low %vm192, %vm191
        %v231 = vsel %vm229, 16711935, 0
        %v232 = vsel %vm230, 16711935, 0
        %v233 = vpack.c.b8 %v232, %v231
        %vm234 = vnez %v233
        %vm235 = vmpackc.low %vm194, %vm193
        %vm236 = vmpackc.low %vm196, %vm195
        %v237 = vsel %vm235, 16711935, 0
        %v238 = vsel %vm236, 16711935, 0
        %v239 = vpack.c.b8 %v238, %v237
        %vm240 = vnez %v239
        %vm241 = vmpackc.low %vm198, %vm197
        %vm242 = vmpackc.low %vm200, %vm199
        %v243 = vsel %vm241, 16711935, 0
        %v244 = vsel %vm242, 16711935, 0
        %v245 = vpack.c.b8 %v244, %v243
        %vm246 = vnez %v245
        %vm247 = vmpackc.low %vm202, %vm201
        %vm248 = vmpackc.low %vm204, %vm203
        %v249 = vsel %vm247, 16711935, 0
        %v250 = vsel %vm248, 16711935, 0
        %v251 = vpack.c.b8 %v250, %v249
        %vm252 = vnez %v251
        %v253 = vsel %vm210, 16843009, 0
        %v254 = vsel %vm216, 16843009, 0
        %v255 = vsel %vm222, 16843009, 0
        %v256 = vsel %vm228, 16843009, 0
        %v257 = vsel %vm234, 16843009, 0
        %v258 = vsel %vm240, 16843009, 0
        %v259 = vsel %vm246, 16843009, 0
        %v260 = vsel %vm252, 16843009, 0
        %261 = vst [vmem:[%s136] sm:$0xff] %v253
        %262 = vst [vmem:[%s136 + $0x8] sm:$0xff] %v254
        %263 = vst [vmem:[%s136 + $0x10] sm:$0xff] %v255
        %264 = vst [vmem:[%s136 + $0x18] sm:$0xff] %v256
        %265 = vst [vmem:[%s136 + $0x20] sm:$0xff] %v257
        %266 = vst [vmem:[%s136 + $0x28] sm:$0xff] %v258
        %267 = vst [vmem:[%s136 + $0x30] sm:$0xff] %v259
        %268 = vst [vmem:[%s136 + $0x38] sm:$0xff] %v260
        %s269 = sand.u32 %s52, 1
        %s270 = scalar_lea.sflag [#allocation4], %s269
        %s271 = sand.u32 %s52, 1
        %s272 = smul.addr %s271, 64
        %s273 = scalar_lea.vmem [#allocation5], %s272
        // Predicated region
        $region29: #{tpu_custom_call.1} parent=23 // pred_check
          %p274 = pneg %p62
        $region30: #{tpu_custom_call.1} parent=23 // pred_check_branch
          %276 = sbr.rel (%p274) target = $region32
        $region31: #{tpu_custom_call.1} parent=23 // pred_region
          %s277 = smul.u32 8, %s18
          %279 = vsyncadd %s270, 0
          %s280 = smul.addr %s277, 8
          %s281 = scalar_lea.hbm %s1, %s280
          %s282 = sshll.u32 %s273, 4
          %s283 = int_to_ptr.vmem [resolvable:$true] %s282
          %s284 = sshll.u32 %s281, 4
          %s285 = int_to_ptr.hbm [resolvable:$true] %s284
          %290 = dma.vmem_to_hbm [thread:$0]  %s283, 1024, %s285, %s270, 128, 128, 8
        $region32: #{tpu_custom_call.1} parent=23 // pred_fallthru
          _
      $region24: #{tpu_custom_call.1} parent=5 // pred_fallthru
        _
      %p291 = scmp.le.s32.totalorder 2, %s13
      // Predicated region
      $region33: #{tpu_custom_call.1} parent=5 // pred_check
        %p292 = pneg %p291
      $region34: #{tpu_custom_call.1} parent=5 // pred_check_branch
        %294 = sbr.rel (%p292) target = $region36
      $region35: #{tpu_custom_call.1} parent=5 // pred_region
        %s295 = ssub.s32 %s13, 2
        // Predicated region
        $region37: #{tpu_custom_call.1} parent=35 // pred_check
          %p296 = pneg %p68
        $region38: #{tpu_custom_call.1} parent=35 // pred_check_branch
          %298 = sbr.rel (%p296) target = $region40
        $region39: #{tpu_custom_call.1} parent=35 // pred_region
          %s299 = sand.u32 %s53, 1
          %s300 = scalar_lea.sflag [#allocation4], %s299
          %s301 = sand.u32 %s53, 1
          %s302 = smul.addr %s301, 64
          %s303 = scalar_lea.vmem [#allocation5], %s302
          %305 = dma.done %s300, 1024
        $region40: #{tpu_custom_call.1} parent=35 // pred_fallthru
          _
      $region36: #{tpu_custom_call.1} parent=5 // pred_fallthru
        _
    $region6: #{tpu_custom_call.1} parent=1 // loop_footer
      %s17 = sadd.s32 1, %s13
    $region7: #{tpu_custom_call.1} parent=1 // loop_footer_branch
      %12 = sbr.rel target = $region3
    $region8: #{tpu_custom_call.1} parent=1 // loop_exit
      _
    %306 = vsyncpa [#allocation3], 1
    %s307 = scalar_lea.sflag [#allocation3], 1
    %308 = vsyncpa %s307, 1
    %309 = vsyncpa [#allocation4], 1
    %s310 = scalar_lea.sflag [#allocation4], 1
    %311 = vsyncpa %s310, 1

</llo_original>
